<compile_context>
chip_gen: v7x
topology: tpu7x:2x2x1
jax: 0.10.0
libtpu: 0.0.40
codegen_flags: <defaults>
</compile_context>

<pallas_src>
import functools

import jax
import jax.numpy as jnp
from jax.experimental import pallas as pl
from jax.experimental.pallas import tpu as pltpu

LANE = 128      # TPU lane width (last dim of a vreg tile)
SUBLANE = 8     # TPU sublane width for f32


def _round_up(n, m):
    return (n + m - 1) // m * m


def _cdiv(a, b):
    return -(-a // b)


def ffn_kernel(x_ref, w0_ref, w_ref, b_ref, o_ref, *, n_layers):
    """Fused MLP on one transposed batch tile (batch on lanes).

    x_ref : (F_pad, TB)            x^T tile, bf16 (features on sublanes)
    w0_ref: (P, F_pad)             W0^T (layer-0 weights), bf16
    w_ref : (n_layers-1, P, P)     W_i^T for layers 1..n-1, bf16
    b_ref : (P, LANE)              column i = bias of layer i, f32
    o_ref : (O_pad, TB)            output^T tile, f32
    """
    h = x_ref[...]                                      # (F_pad, TB) bf16

    # Layer 0: contraction over the real (padded-to-16) feature width only.
    a = jnp.dot(w0_ref[...], h, preferred_element_type=jnp.float32)   # (P, TB) f32
    a = a + b_ref[:, pl.ds(0, 1)]                       # lane-broadcast bias
    h = jnp.maximum(a, 0.0).astype(x_ref.dtype)         # back to bf16 for the MXU

    # Hidden Linear + ReLU layers.
    for i in range(1, n_layers - 1):
        a = jnp.dot(w_ref[i - 1], h, preferred_element_type=jnp.float32)
        a = a + b_ref[:, pl.ds(i, 1)]
        h = jnp.maximum(a, 0.0).astype(x_ref.dtype)

    # Final Linear (no activation), matching the PyTorch forward.
    out = jnp.dot(w_ref[n_layers - 2], h, preferred_element_type=jnp.float32)
    out = out + b_ref[:, pl.ds(n_layers - 1, 1)]
    o_ref[...] = out[: o_ref.shape[0], :].astype(o_ref.dtype)


def pack_params(params, param_dtype=jnp.bfloat16):
    """One-time packing of per-layer (W, b) into kernel-ready slabs.

    Hoisted out of the per-call path: call this once (or whenever params change)
    and pass the result to feedforward_net.
    params: list of (W, b) with W shaped (in, out), b shaped (1, out) or (out,).
    """
    n_layers = len(params)
    assert n_layers >= 2, "kernel assumes at least one hidden layer + final Linear"
    dims = [params[0][0].shape[0]] + [w.shape[1] for w, _ in params]
    P = _round_up(max(dims[1:]), LANE)          # hidden/output widths -> 128
    F_pad = _round_up(dims[0], 16)              # input features -> bf16 sublane pack

    # Layer-0 weights, transposed to (out, in), padded to (P, F_pad).
    w0, _ = params[0]
    w0_t = jnp.zeros((P, F_pad), param_dtype)
    w0_t = w0_t.at[: w0.shape[1], : w0.shape[0]].set(w0.T.astype(param_dtype))

    # Layers 1..n-1, each W^T padded into one (n_layers-1, P, P) slab.
    w_slab = jnp.zeros((n_layers - 1, P, P), param_dtype)
    for i, (w, _) in enumerate(params[1:]):
        w_slab = w_slab.at[i, : w.shape[1], : w.shape[0]].set(w.T.astype(param_dtype))

    # Biases: column i of a (P, LANE) f32 slab (broadcast along lanes in-kernel).
    b_slab = jnp.zeros((P, LANE), jnp.float32)
    for i, (w, b) in enumerate(params):
        b_slab = b_slab.at[: w.shape[1], i].set(
            jnp.reshape(b.astype(jnp.float32), (-1,)))

    return dict(
        w0_t=w0_t, w_slab=w_slab, b_slab=b_slab,
        n_layers=n_layers, n_features=dims[0], n_outputs=dims[-1],
        f_pad=F_pad, p=P, param_dtype=param_dtype,
    )


def _choose_batch_tiling(B, target):
    """Adaptive, megacore-aware tile size (batch lives on lanes -> multiple of 128)."""
    n_tiles = max(1, _cdiv(B, target))
    # Keep the grid even when there is enough batch for two lane-full tiles so
    # v7x's two TensorCores both get work (no effect on v5e/v6e).
    if B >= 2 * LANE and n_tiles % 2 == 1:
        n_tiles += 1
    TB = _round_up(_cdiv(B, n_tiles), LANE)
    return n_tiles, TB, n_tiles * TB


def feedforward_net(x, packed, *, block_batch=None):
    """x: (B, n_features) float array; packed: output of pack_params."""
    n_layers = packed["n_layers"]
    P, F_pad = packed["p"], packed["f_pad"]
    n_features, n_outputs = packed["n_features"], packed["n_outputs"]
    dtype = packed["param_dtype"]

    B = x.shape[0]
    O_pad = _round_up(max(n_outputs, SUBLANE), SUBLANE)
    target = 8192 if block_batch is None else block_batch
    n_tiles, TB, B_pad = _choose_batch_tiling(B, target)

    # x^T: features on sublanes, batch on lanes; only the REAL feature width
    # (padded to 16 for bf16 packing) ever hits HBM.
    xt = jnp.pad(x.astype(dtype).T,
                 ((0, F_pad - n_features), (0, B_pad - B)))

    out_t = pl.pallas_call(
        functools.partial(ffn_kernel, n_layers=n_layers),
        out_shape=jax.ShapeDtypeStruct((O_pad, B_pad), jnp.float32),
        grid_spec=pltpu.PrefetchScalarGridSpec(
            num_scalar_prefetch=0,
            grid=(n_tiles,),
            in_specs=[
                pl.BlockSpec((F_pad, TB), lambda i: (0, i)),                 # x^T tile
                pl.BlockSpec((P, F_pad), lambda i: (0, 0)),                  # resident W0^T
                pl.BlockSpec((n_layers - 1, P, P), lambda i: (0, 0, 0)),     # resident W^T slab
                pl.BlockSpec((P, LANE), lambda i: (0, 0)),                   # resident biases
            ],
            out_specs=pl.BlockSpec((O_pad, TB), lambda i: (0, i)),
        ),
        compiler_params=pltpu.CompilerParams(
            dimension_semantics=("parallel",),       # megacore sharding on v7x
            vmem_limit_bytes=32 * 1024 * 1024,       # covers large TB on v5e too
        ),
    )(xt, packed["w0_t"], packed["w_slab"], packed["b_slab"])

    # Back to (B, n_outputs); transposing the tiny (n_outputs, B) result is cheap.
    return out_t[:n_outputs, :B].T


def init_params(key, n_features, n_outputs, n_hidden=(50, 100, 50, 25)):
    """Deterministic PyTorch-style (kaiming-uniform-ish) init for each Linear."""
    shape = (n_features,) + tuple(n_hidden) + (n_outputs,)
    params = []
    for i in range(len(shape) - 1):
        fan_in, fan_out = shape[i], shape[i + 1]
        key, kw, kb = jax.random.split(key, 3)
        bound = 1.0 / jnp.sqrt(jnp.float32(fan_in))
        # Stored as (in, out); pack_params transposes for the kernel.
        w = jax.random.uniform(kw, (fan_in, fan_out), jnp.float32, -bound, bound)
        b = jax.random.uniform(kb, (1, fan_out), jnp.float32, -bound, bound)
        params.append((w, b))
    return params


def reference_forward(x, params, param_dtype=jnp.bfloat16):
    """Pure-JAX reference mirroring the kernel's bf16-operand / f32-accumulate math.

    NOTE: this is self-consistent with the kernel, not bit-exact fp32 PyTorch.
    """
    h = x.astype(param_dtype)
    for w, b in params[:-1]:
        a = jnp.dot(h, w.astype(param_dtype), preferred_element_type=jnp.float32) + b
        h = jnp.maximum(a, 0.0).astype(param_dtype)
    w, b = params[-1]
    return jnp.dot(h, w.astype(param_dtype), preferred_element_type=jnp.float32) + b


if __name__ == "__main__":
    key = jax.random.PRNGKey(0)

    n_features = 32
    n_outputs = 4
    batch = 8

    key, kx = jax.random.split(key)
    x = jax.random.normal(kx, (batch, n_features), dtype=jnp.float32)

    params = init_params(key, n_features, n_outputs)
    packed = pack_params(params)            # hoisted out of the hot path

    out = feedforward_net(x, packed)
    out = jax.block_until_ready(out)

    ref = reference_forward(x, params)
    assert out.shape == (batch, n_outputs)
    assert jnp.allclose(out, ref, atol=2e-3, rtol=2e-3)

    print("KERNEL_OK")
</pallas_src>

<mosaic_0001>
module attributes {stable_mosaic.version = 11 : i64} {
  func.func @ffn_kernel(%arg0: i32, %arg1: memref<32x128xbf16, #tpu.memory_space<vmem>>, %arg2: memref<128x32xbf16, #tpu.memory_space<vmem>>, %arg3: memref<4x128x128xbf16, #tpu.memory_space<vmem>>, %arg4: memref<128x128xf32, #tpu.memory_space<vmem>>, %arg5: memref<8x128xf32, #tpu.memory_space<vmem>>) attributes {dimension_semantics = [#tpu.dimension_semantics<parallel>], iteration_bounds = array<i64: 1>, scalar_prefetch = 0 : i64, scratch_operands = 0 : i64, tpu.core_type = #tpu.core_type<tc>, window_params = [{transform_indices = @transform_0, window_bounds = array<i64: 32, 128>}, {pipeline_mode = #tpu.pipeline_mode<synchronous>, transform_indices = @transform_1, window_bounds = array<i64: 128, 32>}, {pipeline_mode = #tpu.pipeline_mode<synchronous>, transform_indices = @transform_2, window_bounds = array<i64: 4, 128, 128>}, {pipeline_mode = #tpu.pipeline_mode<synchronous>, transform_indices = @transform_3, window_bounds = array<i64: 128, 128>}, {transform_indices = @transform_4, window_bounds = array<i64: 8, 128>}]} {
    %c0 = arith.constant 0 : index
    %c0_0 = arith.constant 0 : index
    %0 = vector.load %arg1[%c0, %c0_0] : memref<32x128xbf16, #tpu.memory_space<vmem>>, vector<32x128xbf16>
    %c0_1 = arith.constant 0 : index
    %c0_2 = arith.constant 0 : index
    %1 = vector.load %arg2[%c0_1, %c0_2] : memref<128x32xbf16, #tpu.memory_space<vmem>>, vector<128x32xbf16>
    %cst = arith.constant dense<0.000000e+00> : vector<128x128xf32>
    %2 = tpu.matmul %1, %0, %cst {dimension_numbers = #tpu.dot_dimension_numbers<[1], [0], [0], [1], [0, 0, 1, 1], [], []>} : vector<128x32xbf16>, vector<32x128xbf16>, vector<128x128xf32> -> vector<128x128xf32>
    %c0_3 = arith.constant 0 : index
    %c0_4 = arith.constant 0 : index
    %3 = vector.load %arg4[%c0_3, %c0_4] : memref<128x128xf32, #tpu.memory_space<vmem>>, vector<128x1xf32>
    %4 = vector.broadcast %3 : vector<128x1xf32> to vector<128x128xf32>
    %5 = arith.addf %2, %4 : vector<128x128xf32>
    %cst_5 = arith.constant 0.000000e+00 : f32
    %6 = vector.broadcast %cst_5 : f32 to vector<128x128xf32>
    %7 = arith.maximumf %5, %6 : vector<128x128xf32>
    %8 = arith.truncf %7 : vector<128x128xf32> to vector<128x128xbf16>
    %c0_6 = arith.constant 0 : index
    %c0_7 = arith.constant 0 : index
    %c0_8 = arith.constant 0 : index
    %9 = vector.load %arg3[%c0_6, %c0_7, %c0_8] : memref<4x128x128xbf16, #tpu.memory_space<vmem>>, vector<1x128x128xbf16>
    %10 = vector.shape_cast %9 : vector<1x128x128xbf16> to vector<128x128xbf16>
    %cst_9 = arith.constant dense<0.000000e+00> : vector<128x128xf32>
    %11 = tpu.matmul %10, %8, %cst_9 {dimension_numbers = #tpu.dot_dimension_numbers<[1], [0], [0], [1], [0, 0, 1, 1], [], []>} : vector<128x128xbf16>, vector<128x128xbf16>, vector<128x128xf32> -> vector<128x128xf32>
    %c0_10 = arith.constant 0 : index
    %c1 = arith.constant 1 : index
    %12 = vector.load %arg4[%c0_10, %c1] : memref<128x128xf32, #tpu.memory_space<vmem>>, vector<128x1xf32>
    %13 = vector.broadcast %12 : vector<128x1xf32> to vector<128x128xf32>
    %14 = arith.addf %11, %13 : vector<128x128xf32>
    %cst_11 = arith.constant 0.000000e+00 : f32
    %15 = vector.broadcast %cst_11 : f32 to vector<128x128xf32>
    %16 = arith.maximumf %14, %15 : vector<128x128xf32>
    %17 = arith.truncf %16 : vector<128x128xf32> to vector<128x128xbf16>
    %c1_12 = arith.constant 1 : index
    %c0_13 = arith.constant 0 : index
    %c0_14 = arith.constant 0 : index
    %18 = vector.load %arg3[%c1_12, %c0_13, %c0_14] : memref<4x128x128xbf16, #tpu.memory_space<vmem>>, vector<1x128x128xbf16>
    %19 = vector.shape_cast %18 : vector<1x128x128xbf16> to vector<128x128xbf16>
    %cst_15 = arith.constant dense<0.000000e+00> : vector<128x128xf32>
    %20 = tpu.matmul %19, %17, %cst_15 {dimension_numbers = #tpu.dot_dimension_numbers<[1], [0], [0], [1], [0, 0, 1, 1], [], []>} : vector<128x128xbf16>, vector<128x128xbf16>, vector<128x128xf32> -> vector<128x128xf32>
    %c0_16 = arith.constant 0 : index
    %c2 = arith.constant 2 : index
    %21 = vector.load %arg4[%c0_16, %c2] : memref<128x128xf32, #tpu.memory_space<vmem>>, vector<128x1xf32>
    %22 = vector.broadcast %21 : vector<128x1xf32> to vector<128x128xf32>
    %23 = arith.addf %20, %22 : vector<128x128xf32>
    %cst_17 = arith.constant 0.000000e+00 : f32
    %24 = vector.broadcast %cst_17 : f32 to vector<128x128xf32>
    %25 = arith.maximumf %23, %24 : vector<128x128xf32>
    %26 = arith.truncf %25 : vector<128x128xf32> to vector<128x128xbf16>
    %c2_18 = arith.constant 2 : index
    %c0_19 = arith.constant 0 : index
    %c0_20 = arith.constant 0 : index
    %27 = vector.load %arg3[%c2_18, %c0_19, %c0_20] : memref<4x128x128xbf16, #tpu.memory_space<vmem>>, vector<1x128x128xbf16>
    %28 = vector.shape_cast %27 : vector<1x128x128xbf16> to vector<128x128xbf16>
    %cst_21 = arith.constant dense<0.000000e+00> : vector<128x128xf32>
    %29 = tpu.matmul %28, %26, %cst_21 {dimension_numbers = #tpu.dot_dimension_numbers<[1], [0], [0], [1], [0, 0, 1, 1], [], []>} : vector<128x128xbf16>, vector<128x128xbf16>, vector<128x128xf32> -> vector<128x128xf32>
    %c0_22 = arith.constant 0 : index
    %c3 = arith.constant 3 : index
    %30 = vector.load %arg4[%c0_22, %c3] : memref<128x128xf32, #tpu.memory_space<vmem>>, vector<128x1xf32>
    %31 = vector.broadcast %30 : vector<128x1xf32> to vector<128x128xf32>
    %32 = arith.addf %29, %31 : vector<128x128xf32>
    %cst_23 = arith.constant 0.000000e+00 : f32
    %33 = vector.broadcast %cst_23 : f32 to vector<128x128xf32>
    %34 = arith.maximumf %32, %33 : vector<128x128xf32>
    %35 = arith.truncf %34 : vector<128x128xf32> to vector<128x128xbf16>
    %c3_24 = arith.constant 3 : index
    %c0_25 = arith.constant 0 : index
    %c0_26 = arith.constant 0 : index
    %36 = vector.load %arg3[%c3_24, %c0_25, %c0_26] : memref<4x128x128xbf16, #tpu.memory_space<vmem>>, vector<1x128x128xbf16>
    %37 = vector.shape_cast %36 : vector<1x128x128xbf16> to vector<128x128xbf16>
    %cst_27 = arith.constant dense<0.000000e+00> : vector<128x128xf32>
    %38 = tpu.matmul %37, %35, %cst_27 {dimension_numbers = #tpu.dot_dimension_numbers<[1], [0], [0], [1], [0, 0, 1, 1], [], []>} : vector<128x128xbf16>, vector<128x128xbf16>, vector<128x128xf32> -> vector<128x128xf32>
    %c0_28 = arith.constant 0 : index
    %c4 = arith.constant 4 : index
    %39 = vector.load %arg4[%c0_28, %c4] : memref<128x128xf32, #tpu.memory_space<vmem>>, vector<128x1xf32>
    %40 = vector.broadcast %39 : vector<128x1xf32> to vector<128x128xf32>
    %41 = arith.addf %38, %40 : vector<128x128xf32>
    %42 = vector.extract_strided_slice %41 {offsets = [0, 0], sizes = [8, 128], strides = [1, 1]} : vector<128x128xf32> to vector<8x128xf32>
    %c0_29 = arith.constant 0 : index
    %c0_30 = arith.constant 0 : index
    %43 = vector.load %arg5[%c0_29, %c0_30] : memref<8x128xf32, #tpu.memory_space<vmem>>, vector<8x128xf32>
    tpu.vector_store %arg5[%c0_29, %c0_30], %42 {strides = array<i32>} : memref<8x128xf32, #tpu.memory_space<vmem>>, vector<8x128xf32>,
    return
  }
  func.func @transform_0(%arg0: i32) -> (i32, i32) {
    %c0_i32 = arith.constant 0 : i32
    %c0_i32_0 = arith.constant 0 : i32
    return %c0_i32, %arg0 : i32, i32
  }
  func.func @transform_1(%arg0: i32) -> (i32, i32) {
    %c0_i32 = arith.constant 0 : i32
    %c0_i32_0 = arith.constant 0 : i32
    %c0_i32_1 = arith.constant 0 : i32
    return %c0_i32, %c0_i32_0 : i32, i32
  }
  func.func @transform_2(%arg0: i32) -> (i32, i32, i32) {
    %c0_i32 = arith.constant 0 : i32
    %c0_i32_0 = arith.constant 0 : i32
    %c0_i32_1 = arith.constant 0 : i32
    %c0_i32_2 = arith.constant 0 : i32
    return %c0_i32, %c0_i32_0, %c0_i32_1 : i32, i32, i32
  }
  func.func @transform_3(%arg0: i32) -> (i32, i32) {
    %c0_i32 = arith.constant 0 : i32
    %c0_i32_0 = arith.constant 0 : i32
    %c0_i32_1 = arith.constant 0 : i32
    return %c0_i32, %c0_i32_0 : i32, i32
  }
  func.func @transform_4(%arg0: i32) -> (i32, i32) {
    %c0_i32 = arith.constant 0 : i32
    %c0_i32_0 = arith.constant 0 : i32
    return %c0_i32, %arg0 : i32, i32
  }
}

</mosaic_0001>

<llo_original>
// kernel: tpu_custom_call.1
$region0: #{tpu_custom_call.1}
  #allocation0 [shape = 'u32[]', space=smem, size = 0x4, offset = 0x4, fixed_abs, tag = 'smem constant byte address 0x4 - core index']
  #allocation1 [shape = 'u32[144,128]{1,0:T(1,128)}', space=vmem, size = 0x12000, scoped, tag = 'internal scratch']
  %s0 = inlined_call_operand.vmem [shape: bf16[32,128], index: 0, kind: input, shape index: {}]
  %s1 = inlined_call_operand.vmem [shape: bf16[128,32], index: 1, kind: input, shape index: {}]
  %s2 = inlined_call_operand.hbm [shape: bf16[4,128,128], index: 2, kind: input, shape index: {}]
  %s3 = inlined_call_operand.hbm [shape: f32[128,128], index: 3, kind: input, shape index: {}]
  %s4 = inlined_call_operand.hbm [shape: f32[8,128], index: 4, kind: output, shape index: {}]
  %s5 = sld [smem:[#allocation0]]
  $region34: #{tpu_custom_call.1} parent=0
    _
  %s7 = ssub.s32 1, %s5
  %s8 = scalar_select 0, %s7, %s5
  $region1: #{tpu_custom_call.1} parent=0
    #allocation2 [shape = 'u8[131072]{0}', space=vmem, size = 0x20000, scoped, tag = 'input window, operand 2, single buffered']
    #allocation3 [shape = 's32[1]{0}', space=sflag, size = 0x4, scoped, tag = 'scoped memory for tpu_custom_call.1']
    #allocation4 [shape = 's32[1]{0}', space=sflag, size = 0x4, scoped, tag = 'scoped memory for tpu_custom_call.1']
    #allocation5 [shape = 'u8[65536]{0}', space=vmem, size = 0x10000, scoped, tag = 'input window, operand 3, single buffered']
    #allocation6 [shape = 's32[1]{0}', space=sflag, size = 0x4, scoped, tag = 'scoped memory for tpu_custom_call.1']
    #allocation7 [shape = 'u8[4096]{0}', space=vmem, size = 0x1000, scoped, tag = 'output window, operand 0, single buffered']
    %9 = vsyncpa [#allocation3], 0
    %10 = vsyncpa [#allocation6], 0
    %11 = vsyncpa [#allocation4], 0
    // Predicated region
    $region2: #{tpu_custom_call.1} parent=1 // pred_check
      _
    $region3: #{tpu_custom_call.1} parent=1 // pred_check_branch
      %13 = sbr.rel (0) target = $region5
    $region4: #{tpu_custom_call.1} parent=1 // pred_region
      _
    $region5: #{tpu_custom_call.1} parent=1 // pred_fallthru
      _
    // Predicated region
    $region6: #{tpu_custom_call.1} parent=1 // pred_check
      _
    $region7: #{tpu_custom_call.1} parent=1 // pred_check_branch
      %15 = sbr.rel (0) target = $region9
    $region8: #{tpu_custom_call.1} parent=1 // pred_region
      _
    $region9: #{tpu_custom_call.1} parent=1 // pred_fallthru
      _
    // Predicated region
    $region10: #{tpu_custom_call.1} parent=1 // pred_check
      _
    $region11: #{tpu_custom_call.1} parent=1 // pred_check_branch
      %17 = sbr.rel (0) target = $region13
    $region12: #{tpu_custom_call.1} parent=1 // pred_region
      %s19 = ssub.s32 4096, 4096
      %20 = vsyncadd [#allocation3], %s19
      %s21 = sshll.u32 [#allocation2], 4
      %s22 = int_to_ptr.vmem [resolvable:$true] %s21
      %27 = dma.hbm_to_vmem [thread:$0]  %s2, 4096, %s22, [#allocation3], 64, 64, 4
    $region13: #{tpu_custom_call.1} parent=1 // pred_fallthru
      _
    // Predicated region
    $region14: #{tpu_custom_call.1} parent=1 // pred_check
      _
    $region15: #{tpu_custom_call.1} parent=1 // pred_check_branch
      %29 = sbr.rel (0) target = $region17
    $region16: #{tpu_custom_call.1} parent=1 // pred_region
      %s31 = ssub.s32 2048, 2048
      %32 = vsyncadd [#allocation6], %s31
      %s33 = sshll.u32 [#allocation5], 4
      %s34 = int_to_ptr.vmem [resolvable:$true] %s33
      %39 = dma.hbm_to_vmem [thread:$0]  %s3, 2048, %s34, [#allocation6], 128, 128, 8
    $region17: #{tpu_custom_call.1} parent=1 // pred_fallthru
      _
    // Predicated region
    $region18: #{tpu_custom_call.1} parent=1 // pred_check
      _
    $region19: #{tpu_custom_call.1} parent=1 // pred_check_branch
      %41 = sbr.rel (0) target = $region21
    $region20: #{tpu_custom_call.1} parent=1 // pred_region
      %42 = dma.done [#allocation3], 4096
    $region21: #{tpu_custom_call.1} parent=1 // pred_fallthru
      _
    // Predicated region
    $region22: #{tpu_custom_call.1} parent=1 // pred_check
      _
    $region23: #{tpu_custom_call.1} parent=1 // pred_check_branch
      %44 = sbr.rel (0) target = $region25
    $region24: #{tpu_custom_call.1} parent=1 // pred_region
      %45 = dma.done [#allocation6], 2048
    $region25: #{tpu_custom_call.1} parent=1 // pred_fallthru
      _
    %v47 = vld [vmem:[%s0] sm:$0xf]
    %v48 = vld [vmem:[%s0 + $0x4] sm:$0xf]
    %v49 = vld [vmem:[%s0 + $0x8] sm:$0xf]
    %v50 = vld [vmem:[%s0 + $0xc] sm:$0xf]
    %v51 = vld [vmem:[%s1] sm:$0xf]
    %v52 = vld [vmem:[%s1 + $0x4] sm:$0xf]
    %v53 = vld [vmem:[%s1 + $0x8] sm:$0xf]
    %v54 = vld [vmem:[%s1 + $0xc] sm:$0xf]
    %v55 = vld [vmem:[%s1 + $0x10] sm:$0xf]
    %v56 = vld [vmem:[%s1 + $0x14] sm:$0xf]
    %v57 = vld [vmem:[%s1 + $0x18] sm:$0xf]
    %v58 = vld [vmem:[%s1 + $0x1c] sm:$0xf]
    %v59 = vld [vmem:[%s1 + $0x20] sm:$0xf]
    %v60 = vld [vmem:[%s1 + $0x24] sm:$0xf]
    %v61 = vld [vmem:[%s1 + $0x28] sm:$0xf]
    %v62 = vld [vmem:[%s1 + $0x2c] sm:$0xf]
    %v63 = vld [vmem:[%s1 + $0x30] sm:$0xf]
    %v64 = vld [vmem:[%s1 + $0x34] sm:$0xf]
    %v65 = vld [vmem:[%s1 + $0x38] sm:$0xf]
    %v66 = vld [vmem:[%s1 + $0x3c] sm:$0xf]
    %v67 = vld [vmem:[#allocation5] sm:$0xff]
    %v68 = vld [vmem:[#allocation5 + $0x8] sm:$0xff]
    %v69 = vld [vmem:[#allocation5 + $0x10] sm:$0xff]
    %v70 = vld [vmem:[#allocation5 + $0x18] sm:$0xff]
    %v71 = vld [vmem:[#allocation5 + $0x20] sm:$0xff]
    %v72 = vld [vmem:[#allocation5 + $0x28] sm:$0xff]
    %v73 = vld [vmem:[#allocation5 + $0x30] sm:$0xff]
    %v74 = vld [vmem:[#allocation5 + $0x38] sm:$0xff]
    %v75 = vld [vmem:[#allocation5 + $0x40] sm:$0xff]
    %v76 = vld [vmem:[#allocation5 + $0x48] sm:$0xff]
    %v77 = vld [vmem:[#allocation5 + $0x50] sm:$0xff]
    %v78 = vld [vmem:[#allocation5 + $0x58] sm:$0xff]
    %v79 = vld [vmem:[#allocation5 + $0x60] sm:$0xff]
    %v80 = vld [vmem:[#allocation5 + $0x68] sm:$0xff]
    %v81 = vld [vmem:[#allocation5 + $0x70] sm:$0xff]
    %v82 = vld [vmem:[#allocation5 + $0x78] sm:$0xff]
    %84 = vset.pattern.permute.xlu0 0
    %85 = vperm.xlu0 %84, %v67
    %v86 = vpop.permute.xlu0 %85
    %89 = vset.pattern.permute.xlu0 0
    %90 = vperm.xlu0 %89, %v68
    %v91 = vpop.permute.xlu0 %90
    %94 = vset.pattern.permute.xlu0 0
    %95 = vperm.xlu0 %94, %v69
    %v96 = vpop.permute.xlu0 %95
    %99 = vset.pattern.permute.xlu0 0
    %100 = vperm.xlu0 %99, %v70
    %v101 = vpop.permute.xlu0 %100
    %104 = vset.pattern.permute.xlu0 0
    %105 = vperm.xlu0 %104, %v71
    %v106 = vpop.permute.xlu0 %105
    %109 = vset.pattern.permute.xlu0 0
    %110 = vperm.xlu0 %109, %v72
    %v111 = vpop.permute.xlu0 %110
    %114 = vset.pattern.permute.xlu0 0
    %115 = vperm.xlu0 %114, %v73
    %v116 = vpop.permute.xlu0 %115
    %119 = vset.pattern.permute.xlu0 0
    %120 = vperm.xlu0 %119, %v74
    %v121 = vpop.permute.xlu0 %120
    %124 = vset.pattern.permute.xlu0 0
    %125 = vperm.xlu0 %124, %v75
    %v126 = vpop.permute.xlu0 %125
    %129 = vset.pattern.permute.xlu0 0
    %130 = vperm.xlu0 %129, %v76
    %v131 = vpop.permute.xlu0 %130
    %134 = vset.pattern.permute.xlu0 0
    %135 = vperm.xlu0 %134, %v77
    %v136 = vpop.permute.xlu0 %135
    %139 = vset.pattern.permute.xlu0 0
    %140 = vperm.xlu0 %139, %v78
    %v141 = vpop.permute.xlu0 %140
    %144 = vset.pattern.permute.xlu0 0
    %145 = vperm.xlu0 %144, %v79
    %v146 = vpop.permute.xlu0 %145
    %149 = vset.pattern.permute.xlu0 0
    %150 = vperm.xlu0 %149, %v80
    %v151 = vpop.permute.xlu0 %150
    %154 = vset.pattern.permute.xlu0 0
    %155 = vperm.xlu0 %154, %v81
    %v156 = vpop.permute.xlu0 %155
    %159 = vset.pattern.permute.xlu0 0
    %160 = vperm.xlu0 %159, %v82
    %v161 = vpop.permute.xlu0 %160
    %v179 = vunpack.c.l.b16 %v51
    %v180 = vunpack.c.l.b16 %v52
    %v181 = vunpack.c.l.b16 %v53
    %v182 = vunpack.c.l.b16 %v54
    %v183 = vunpack.c.l.b16 %v55
    %v184 = vunpack.c.l.b16 %v56
    %v185 = vunpack.c.l.b16 %v57
    %v186 = vunpack.c.l.b16 %v58
    %v187 = vunpack.c.l.b16 %v59
    %v188 = vunpack.c.l.b16 %v60
    %v189 = vunpack.c.l.b16 %v61
    %v190 = vunpack.c.l.b16 %v62
    %v191 = vunpack.c.l.b16 %v63
    %v192 = vunpack.c.l.b16 %v64
    %v193 = vunpack.c.l.b16 %v65
    %v194 = vunpack.c.l.b16 %v66
    %v195 = vpack.c.b16 %v180, %v179
    %v196 = vpack.c.b16 %v182, %v181
    %v197 = vpack.c.b16 %v184, %v183
    %v198 = vpack.c.b16 %v186, %v185
    %v199 = vpack.c.b16 %v188, %v187
    %v200 = vpack.c.b16 %v190, %v189
    %v201 = vpack.c.b16 %v192, %v191
    %v202 = vpack.c.b16 %v194, %v193
    %v207 = vunpack.c.l.b16 %v47
    %v208 = vunpack.c.l.b16 %v48
    %v209 = vunpack.c.l.b16 %v49
    %v210 = vunpack.c.l.b16 %v50
    %v211 = vpack.c.b16 %v208, %v207
    %v212 = vpack.c.b16 %v210, %v209
    %vm215 = vcmask 261120
    %v217 = vsel %vm215, %v195, 0
    %v220 = vsel %vm215, %v196, 0
    %v223 = vsel %vm215, %v197, 0
    %v226 = vsel %vm215, %v198, 0
    %v229 = vsel %vm215, %v199, 0
    %v232 = vsel %vm215, %v200, 0
    %v235 = vsel %vm215, %v201, 0
    %v238 = vsel %vm215, %v202, 0
    %240 = vmatprep.subr.bf16.mxu0 0
    %241 = vmatpush1.bf16.msra.mxu0 %v211
    %242 = vmatprep.subr.bf16.mxu0 0
    %243 = vmatpush1.bf16.msra.mxu0 %v212
    %244 = vmatprep.subr.bf16.mxu0 0
    %245 = vmatpush1.bf16.msra.mxu0 0
    %246 = vmatprep.subr.bf16.mxu0 0
    %247 = vmatpush1.bf16.msra.mxu0 0
    %248 = vmatprep.subr.bf16.mxu0 0
    %249 = vmatpush1.bf16.msra.mxu0 0
    %250 = vmatprep.subr.bf16.mxu0 0
    %251 = vmatpush1.bf16.msra.mxu0 0
    %252 = vmatprep.subr.bf16.mxu0 0
    %253 = vmatpush1.bf16.msra.mxu0 0
    %254 = vmatprep.subr.bf16.mxu0 0
    %255 = vmatpush1.bf16.msra.mxu0 0
    %256 = vmatprep.subr.bf16.mxu0 0
    %257 = vmatpush1.bf16.msra.mxu0 0
    %258 = vmatprep.subr.bf16.mxu0 0
    %259 = vmatpush1.bf16.msra.mxu0 0
    %260 = vmatprep.subr.bf16.mxu0 0
    %261 = vmatpush1.bf16.msra.mxu0 0
    %262 = vmatprep.subr.bf16.mxu0 0
    %263 = vmatpush1.bf16.msra.mxu0 0
    %264 = vmatprep.subr.bf16.mxu0 0
    %265 = vmatpush1.bf16.msra.mxu0 0
    %266 = vmatprep.subr.bf16.mxu0 0
    %267 = vmatpush1.bf16.msra.mxu0 0
    %268 = vmatprep.subr.bf16.mxu0 0
    %269 = vmatpush1.bf16.msra.mxu0 0
    %270 = vmatprep.subr.bf16.mxu0 0
    %271 = vmatpush1.bf16.msra.mxu0 0
    %272 = vmatprep.mubr.bf16.mxu0 0
    %273 = vmatmul.mubr.bf16.gmra.mrb[0].mxu0 %v217
    %v274 = vpop.f32.mrb[0].mxu0
    %v275 = vadd.f32 %v86, %v274
    %v276 = vpop.f32.mrb[0].mxu0
    %v277 = vpop.f32.mrb[0].mxu0
    %v278 = vadd.f32 %v91, %v277
    %v279 = vpop.f32.mrb[0].mxu0
    %280 = vmatprep.mubr.bf16.mxu0 0
    %281 = vmatmul.mubr.bf16.gmra.mrb[0].mxu0 %v220
    %v282 = vpop.f32.mrb[0].mxu0
    %v283 = vadd.f32 %v96, %v282
    %v284 = vpop.f32.mrb[0].mxu0
    %v285 = vpop.f32.mrb[0].mxu0
    %v286 = vadd.f32 %v101, %v285
    %v287 = vpop.f32.mrb[0].mxu0
    %288 = vmatprep.mubr.bf16.mxu0 0
    %289 = vmatmul.mubr.bf16.gmra.mrb[0].mxu0 %v223
    %v290 = vpop.f32.mrb[0].mxu0
    %v291 = vadd.f32 %v106, %v290
    %v292 = vpop.f32.mrb[0].mxu0
    %v293 = vpop.f32.mrb[0].mxu0
    %v294 = vadd.f32 %v111, %v293
    %v295 = vpop.f32.mrb[0].mxu0
    %296 = vmatprep.mubr.bf16.mxu0 0
    %297 = vmatmul.mubr.bf16.gmra.mrb[0].mxu0 %v226
    %v298 = vpop.f32.mrb[0].mxu0
    %v299 = vadd.f32 %v116, %v298
    %v300 = vpop.f32.mrb[0].mxu0
    %v301 = vpop.f32.mrb[0].mxu0
    %v302 = vadd.f32 %v121, %v301
    %v303 = vpop.f32.mrb[0].mxu0
    %304 = vmatprep.mubr.bf16.mxu0 0
    %305 = vmatmul.mubr.bf16.gmra.mrb[0].mxu0 %v229
    %v306 = vpop.f32.mrb[0].mxu0
    %v307 = vadd.f32 %v126, %v306
    %v308 = vpop.f32.mrb[0].mxu0
    %v309 = vpop.f32.mrb[0].mxu0
    %v310 = vadd.f32 %v131, %v309
    %v311 = vpop.f32.mrb[0].mxu0
    %312 = vmatprep.mubr.bf16.mxu0 0
    %313 = vmatmul.mubr.bf16.gmra.mrb[0].mxu0 %v232
    %v314 = vpop.f32.mrb[0].mxu0
    %v315 = vadd.f32 %v136, %v314
    %v316 = vpop.f32.mrb[0].mxu0
    %v317 = vpop.f32.mrb[0].mxu0
    %v318 = vadd.f32 %v141, %v317
    %v319 = vpop.f32.mrb[0].mxu0
    %320 = vmatprep.mubr.bf16.mxu0 0
    %321 = vmatmul.mubr.bf16.gmra.mrb[0].mxu0 %v235
    %v322 = vpop.f32.mrb[0].mxu0
    %v323 = vadd.f32 %v146, %v322
    %v324 = vpop.f32.mrb[0].mxu0
    %v325 = vpop.f32.mrb[0].mxu0
    %v326 = vadd.f32 %v151, %v325
    %v327 = vpop.f32.mrb[0].mxu0
    %328 = vmatprep.mubr.bf16.mxu0 0
    %329 = vmatmul.mubr.bf16.gmra.mrb[0].mxu0 %v238
    %v330 = vpop.f32.mrb[0].mxu0
    %v331 = vadd.f32 %v156, %v330
    %v332 = vpop.f32.mrb[0].mxu0
    %v333 = vpop.f32.mrb[0].mxu0
    %v334 = vadd.f32 %v161, %v333
    %v335 = vpop.f32.mrb[0].mxu0
    %336 = vdwg.mxu0
    %v337 = vmax.f32 %v275, 0.0
    %v338 = vmax.f32 %v278, 0.0
    %v339 = vmax.f32 %v283, 0.0
    %v340 = vmax.f32 %v286, 0.0
    %v341 = vmax.f32 %v291, 0.0
    %v342 = vmax.f32 %v294, 0.0
    %v343 = vmax.f32 %v299, 0.0
    %v344 = vmax.f32 %v302, 0.0
    %v345 = vmax.f32 %v307, 0.0
    %v346 = vmax.f32 %v310, 0.0
    %v347 = vmax.f32 %v315, 0.0
    %v348 = vmax.f32 %v318, 0.0
    %v349 = vmax.f32 %v323, 0.0
    %v350 = vmax.f32 %v326, 0.0
    %v351 = vmax.f32 %v331, 0.0
    %v352 = vmax.f32 %v334, 0.0
    %v353 = vpack.c.bf16 %v338, %v337
    %v354 = vpack.c.bf16 %v340, %v339
    %v355 = vpack.c.bf16 %v342, %v341
    %v356 = vpack.c.bf16 %v344, %v343
    %v357 = vpack.c.bf16 %v346, %v345
    %v358 = vpack.c.bf16 %v348, %v347
    %v359 = vpack.c.bf16 %v350, %v349
    %v360 = vpack.c.bf16 %v352, %v351
    %v361 = vld [vmem:[#allocation2] sm:$0xf]
    %v362 = vld [vmem:[#allocation2 + $0x4] sm:$0xf]
    %v363 = vld [vmem:[#allocation2 + $0x8] sm:$0xf]
    %v364 = vld [vmem:[#allocation2 + $0xc] sm:$0xf]
    %v365 = vld [vmem:[#allocation2 + $0x10] sm:$0xf]
    %v366 = vld [vmem:[#allocation2 + $0x14] sm:$0xf]
    %v367 = vld [vmem:[#allocation2 + $0x18] sm:$0xf]
    %v368 = vld [vmem:[#allocation2 + $0x1c] sm:$0xf]
    %v369 = vld [vmem:[#allocation2 + $0x20] sm:$0xf]
    %v370 = vld [vmem:[#allocation2 + $0x24] sm:$0xf]
    %v371 = vld [vmem:[#allocation2 + $0x28] sm:$0xf]
    %v372 = vld [vmem:[#allocation2 + $0x2c] sm:$0xf]
    %v373 = vld [vmem:[#allocation2 + $0x30] sm:$0xf]
    %v374 = vld [vmem:[#allocation2 + $0x34] sm:$0xf]
    %v375 = vld [vmem:[#allocation2 + $0x38] sm:$0xf]
    %v376 = vld [vmem:[#allocation2 + $0x3c] sm:$0xf]
    %377 = vset.pattern.permute.xlu0 1
    %378 = vperm.xlu0 %377, %v67
    %v379 = vpop.permute.xlu0 %378
    %381 = vset.pattern.permute.xlu0 1
    %382 = vperm.xlu0 %381, %v68
    %v383 = vpop.permute.xlu0 %382
    %385 = vset.pattern.permute.xlu0 1
    %386 = vperm.xlu0 %385, %v69
    %v387 = vpop.permute.xlu0 %386
    %389 = vset.pattern.permute.xlu0 1
    %390 = vperm.xlu0 %389, %v70
    %v391 = vpop.permute.xlu0 %390
    %393 = vset.pattern.permute.xlu0 1
    %394 = vperm.xlu0 %393, %v71
    %v395 = vpop.permute.xlu0 %394
    %397 = vset.pattern.permute.xlu0 1
    %398 = vperm.xlu0 %397, %v72
    %v399 = vpop.permute.xlu0 %398
    %401 = vset.pattern.permute.xlu0 1
    %402 = vperm.xlu0 %401, %v73
    %v403 = vpop.permute.xlu0 %402
    %405 = vset.pattern.permute.xlu0 1
    %406 = vperm.xlu0 %405, %v74
    %v407 = vpop.permute.xlu0 %406
    %409 = vset.pattern.permute.xlu0 1
    %410 = vperm.xlu0 %409, %v75
    %v411 = vpop.permute.xlu0 %410
    %413 = vset.pattern.permute.xlu0 1
    %414 = vperm.xlu0 %413, %v76
    %v415 = vpop.permute.xlu0 %414
    %417 = vset.pattern.permute.xlu0 1
    %418 = vperm.xlu0 %417, %v77
    %v419 = vpop.permute.xlu0 %418
    %421 = vset.pattern.permute.xlu0 1
    %422 = vperm.xlu0 %421, %v78
    %v423 = vpop.permute.xlu0 %422
    %425 = vset.pattern.permute.xlu0 1
    %426 = vperm.xlu0 %425, %v79
    %v427 = vpop.permute.xlu0 %426
    %429 = vset.pattern.permute.xlu0 1
    %430 = vperm.xlu0 %429, %v80
    %v431 = vpop.permute.xlu0 %430
    %433 = vset.pattern.permute.xlu0 1
    %434 = vperm.xlu0 %433, %v81
    %v435 = vpop.permute.xlu0 %434
    %437 = vset.pattern.permute.xlu0 1
    %438 = vperm.xlu0 %437, %v82
    %v439 = vpop.permute.xlu0 %438
    %v457 = vunpack.c.l.b16 %v361
    %v458 = vunpack.c.l.b16 %v362
    %v459 = vunpack.c.l.b16 %v363
    %v460 = vunpack.c.l.b16 %v364
    %v461 = vunpack.c.l.b16 %v365
    %v462 = vunpack.c.l.b16 %v366
    %v463 = vunpack.c.l.b16 %v367
    %v464 = vunpack.c.l.b16 %v368
    %v465 = vunpack.c.l.b16 %v369
    %v466 = vunpack.c.l.b16 %v370
    %v467 = vunpack.c.l.b16 %v371
    %v468 = vunpack.c.l.b16 %v372
    %v469 = vunpack.c.l.b16 %v373
    %v470 = vunpack.c.l.b16 %v374
    %v471 = vunpack.c.l.b16 %v375
    %v472 = vunpack.c.l.b16 %v376
    %v473 = vpack.c.b16 %v458, %v457
    %v474 = vpack.c.b16 %v460, %v459
    %v475 = vpack.c.b16 %v462, %v461
    %v476 = vpack.c.b16 %v464, %v463
    %v477 = vpack.c.b16 %v466, %v465
    %v478 = vpack.c.b16 %v468, %v467
    %v479 = vpack.c.b16 %v470, %v469
    %v480 = vpack.c.b16 %v472, %v471
    %489 = vmatprep.subr.bf16.mxu0 0
    %490 = vmatpush1.bf16.msra.mxu0 %v353
    %491 = vmatprep.subr.bf16.mxu0 0
    %492 = vmatpush1.bf16.msra.mxu0 %v354
    %493 = vmatprep.subr.bf16.mxu0 0
    %494 = vmatpush1.bf16.msra.mxu0 %v355
    %495 = vmatprep.subr.bf16.mxu0 0
    %496 = vmatpush1.bf16.msra.mxu0 %v356
    %497 = vmatprep.subr.bf16.mxu0 0
    %498 = vmatpush1.bf16.msra.mxu0 %v357
    %499 = vmatprep.subr.bf16.mxu0 0
    %500 = vmatpush1.bf16.msra.mxu0 %v358
    %501 = vmatprep.subr.bf16.mxu0 0
    %502 = vmatpush1.bf16.msra.mxu0 %v359
    %503 = vmatprep.subr.bf16.mxu0 0
    %504 = vmatpush1.bf16.msra.mxu0 %v360
    %505 = vmatprep.subr.bf16.mxu0 0
    %506 = vmatpush1.bf16.msra.mxu0 0
    %507 = vmatprep.subr.bf16.mxu0 0
    %508 = vmatpush1.bf16.msra.mxu0 0
    %509 = vmatprep.subr.bf16.mxu0 0
    %510 = vmatpush1.bf16.msra.mxu0 0
    %511 = vmatprep.subr.bf16.mxu0 0
    %512 = vmatpush1.bf16.msra.mxu0 0
    %513 = vmatprep.subr.bf16.mxu0 0
    %514 = vmatpush1.bf16.msra.mxu0 0
    %515 = vmatprep.subr.bf16.mxu0 0
    %516 = vmatpush1.bf16.msra.mxu0 0
    %517 = vmatprep.subr.bf16.mxu0 0
    %518 = vmatpush1.bf16.msra.mxu0 0
    %519 = vmatprep.subr.bf16.mxu0 0
    %520 = vmatpush1.bf16.msra.mxu0 0
    %521 = vmatprep.mubr.bf16.mxu0 0
    %522 = vmatmul.mubr.bf16.gmra.mrb[0].mxu0 %v473
    %v523 = vpop.f32.mrb[0].mxu0
    %v524 = vadd.f32 %v379, %v523
    %v525 = vpop.f32.mrb[0].mxu0
    %v526 = vpop.f32.mrb[0].mxu0
    %v527 = vadd.f32 %v383, %v526
    %v528 = vpop.f32.mrb[0].mxu0
    %529 = vmatprep.mubr.bf16.mxu0 0
    %530 = vmatmul.mubr.bf16.gmra.mrb[0].mxu0 %v474
    %v531 = vpop.f32.mrb[0].mxu0
    %v532 = vadd.f32 %v387, %v531
    %v533 = vpop.f32.mrb[0].mxu0
    %v534 = vpop.f32.mrb[0].mxu0
    %v535 = vadd.f32 %v391, %v534
    %v536 = vpop.f32.mrb[0].mxu0
    %537 = vmatprep.mubr.bf16.mxu0 0
    %538 = vmatmul.mubr.bf16.gmra.mrb[0].mxu0 %v475
    %v539 = vpop.f32.mrb[0].mxu0
    %v540 = vadd.f32 %v395, %v539
    %v541 = vpop.f32.mrb[0].mxu0
    %v542 = vpop.f32.mrb[0].mxu0
    %v543 = vadd.f32 %v399, %v542
    %v544 = vpop.f32.mrb[0].mxu0
    %545 = vmatprep.mubr.bf16.mxu0 0
    %546 = vmatmul.mubr.bf16.gmra.mrb[0].mxu0 %v476
    %v547 = vpop.f32.mrb[0].mxu0
    %v548 = vadd.f32 %v403, %v547
    %v549 = vpop.f32.mrb[0].mxu0
    %v550 = vpop.f32.mrb[0].mxu0
    %v551 = vadd.f32 %v407, %v550
    %v552 = vpop.f32.mrb[0].mxu0
    %553 = vmatprep.mubr.bf16.mxu0 0
    %554 = vmatmul.mubr.bf16.gmra.mrb[0].mxu0 %v477
    %v555 = vpop.f32.mrb[0].mxu0
    %v556 = vadd.f32 %v411, %v555
    %v557 = vpop.f32.mrb[0].mxu0
    %v558 = vpop.f32.mrb[0].mxu0
    %v559 = vadd.f32 %v415, %v558
    %v560 = vpop.f32.mrb[0].mxu0
    %561 = vmatprep.mubr.bf16.mxu0 0
    %562 = vmatmul.mubr.bf16.gmra.mrb[0].mxu0 %v478
    %v563 = vpop.f32.mrb[0].mxu0
    %v564 = vadd.f32 %v419, %v563
    %v565 = vpop.f32.mrb[0].mxu0
    %v566 = vpop.f32.mrb[0].mxu0
    %v567 = vadd.f32 %v423, %v566
    %v568 = vpop.f32.mrb[0].mxu0
    %569 = vmatprep.mubr.bf16.mxu0 0
    %570 = vmatmul.mubr.bf16.gmra.mrb[0].mxu0 %v479
    %v571 = vpop.f32.mrb[0].mxu0
    %v572 = vadd.f32 %v427, %v571
    %v573 = vpop.f32.mrb[0].mxu0
    %v574 = vpop.f32.mrb[0].mxu0
    %v575 = vadd.f32 %v431, %v574
    %v576 = vpop.f32.mrb[0].mxu0
    %577 = vmatprep.mubr.bf16.mxu0 0
    %578 = vmatmul.mubr.bf16.gmra.mrb[0].mxu0 %v480
    %v579 = vpop.f32.mrb[0].mxu0
    %v580 = vadd.f32 %v435, %v579
    %v581 = vpop.f32.mrb[0].mxu0
    %v582 = vpop.f32.mrb[0].mxu0
    %v583 = vadd.f32 %v439, %v582
    %v584 = vpop.f32.mrb[0].mxu0
    %585 = vdwg.mxu0
    %v586 = vmax.f32 %v524, 0.0
    %v587 = vmax.f32 %v527, 0.0
    %v588 = vmax.f32 %v532, 0.0
    %v589 = vmax.f32 %v535, 0.0
    %v590 = vmax.f32 %v540, 0.0
    %v591 = vmax.f32 %v543, 0.0
    %v592 = vmax.f32 %v548, 0.0
    %v593 = vmax.f32 %v551, 0.0
    %v594 = vmax.f32 %v556, 0.0
    %v595 = vmax.f32 %v559, 0.0
    %v596 = vmax.f32 %v564, 0.0
    %v597 = vmax.f32 %v567, 0.0
    %v598 = vmax.f32 %v572, 0.0
    %v599 = vmax.f32 %v575, 0.0
    %v600 = vmax.f32 %v580, 0.0
    %v601 = vmax.f32 %v583, 0.0
    %v602 = vpack.c.bf16 %v587, %v586
    %v603 = vpack.c.bf16 %v589, %v588
    %v604 = vpack.c.bf16 %v591, %v590
    %v605 = vpack.c.bf16 %v593, %v592
    %v606 = vpack.c.bf16 %v595, %v594
    %v607 = vpack.c.bf16 %v597, %v596
    %v608 = vpack.c.bf16 %v599, %v598
    %v609 = vpack.c.bf16 %v601, %v600
    %s610 = scalar_lea.vmem [#allocation2], 64
    %v611 = vld [vmem:[%s610] sm:$0xf]
    %v612 = vld [vmem:[%s610 + $0x4] sm:$0xf]
    %v613 = vld [vmem:[%s610 + $0x8] sm:$0xf]
    %v614 = vld [vmem:[%s610 + $0xc] sm:$0xf]
    %v615 = vld [vmem:[%s610 + $0x10] sm:$0xf]
    %v616 = vld [vmem:[%s610 + $0x14] sm:$0xf]
    %v617 = vld [vmem:[%s610 + $0x18] sm:$0xf]
    %v618 = vld [vmem:[%s610 + $0x1c] sm:$0xf]
    %v619 = vld [vmem:[%s610 + $0x20] sm:$0xf]
    %v620 = vld [vmem:[%s610 + $0x24] sm:$0xf]
    %v621 = vld [vmem:[%s610 + $0x28] sm:$0xf]
    %v622 = vld [vmem:[%s610 + $0x2c] sm:$0xf]
    %v623 = vld [vmem:[%s610 + $0x30] sm:$0xf]
    %v624 = vld [vmem:[%s610 + $0x34] sm:$0xf]
    %v625 = vld [vmem:[%s610 + $0x38] sm:$0xf]
    %v626 = vld [vmem:[%s610 + $0x3c] sm:$0xf]
    %627 = vset.pattern.permute.xlu0 2
    %628 = vperm.xlu0 %627, %v67
    %v629 = vpop.permute.xlu0 %628
    %631 = vset.pattern.permute.xlu0 2
    %632 = vperm.xlu0 %631, %v68
    %v633 = vpop.permute.xlu0 %632
    %635 = vset.pattern.permute.xlu0 2
    %636 = vperm.xlu0 %635, %v69
    %v637 = vpop.permute.xlu0 %636
    %639 = vset.pattern.permute.xlu0 2
    %640 = vperm.xlu0 %639, %v70
    %v641 = vpop.permute.xlu0 %640
    %643 = vset.pattern.permute.xlu0 2
    %644 = vperm.xlu0 %643, %v71
    %v645 = vpop.permute.xlu0 %644
    %647 = vset.pattern.permute.xlu0 2
    %648 = vperm.xlu0 %647, %v72
    %v649 = vpop.permute.xlu0 %648
    %651 = vset.pattern.permute.xlu0 2
    %652 = vperm.xlu0 %651, %v73
    %v653 = vpop.permute.xlu0 %652
    %655 = vset.pattern.permute.xlu0 2
    %656 = vperm.xlu0 %655, %v74
    %v657 = vpop.permute.xlu0 %656
    %659 = vset.pattern.permute.xlu0 2
    %660 = vperm.xlu0 %659, %v75
    %v661 = vpop.permute.xlu0 %660
    %663 = vset.pattern.permute.xlu0 2
    %664 = vperm.xlu0 %663, %v76
    %v665 = vpop.permute.xlu0 %664
    %667 = vset.pattern.permute.xlu0 2
    %668 = vperm.xlu0 %667, %v77
    %v669 = vpop.permute.xlu0 %668
    %671 = vset.pattern.permute.xlu0 2
    %672 = vperm.xlu0 %671, %v78
    %v673 = vpop.permute.xlu0 %672
    %675 = vset.pattern.permute.xlu0 2
    %676 = vperm.xlu0 %675, %v79
    %v677 = vpop.permute.xlu0 %676
    %679 = vset.pattern.permute.xlu0 2
    %680 = vperm.xlu0 %679, %v80
    %v681 = vpop.permute.xlu0 %680
    %683 = vset.pattern.permute.xlu0 2
    %684 = vperm.xlu0 %683, %v81
    %v685 = vpop.permute.xlu0 %684
    %687 = vset.pattern.permute.xlu0 2
    %688 = vperm.xlu0 %687, %v82
    %v689 = vpop.permute.xlu0 %688
    %v707 = vunpack.c.l.b16 %v611
    %v708 = vunpack.c.l.b16 %v612
    %v709 = vunpack.c.l.b16 %v613
    %v710 = vunpack.c.l.b16 %v614
    %v711 = vunpack.c.l.b16 %v615
    %v712 = vunpack.c.l.b16 %v616
    %v713 = vunpack.c.l.b16 %v617
    %v714 = vunpack.c.l.b16 %v618
    %v715 = vunpack.c.l.b16 %v619
    %v716 = vunpack.c.l.b16 %v620
    %v717 = vunpack.c.l.b16 %v621
    %v718 = vunpack.c.l.b16 %v622
    %v719 = vunpack.c.l.b16 %v623
    %v720 = vunpack.c.l.b16 %v624
    %v721 = vunpack.c.l.b16 %v625
    %v722 = vunpack.c.l.b16 %v626
    %v723 = vpack.c.b16 %v708, %v707
    %v724 = vpack.c.b16 %v710, %v709
    %v725 = vpack.c.b16 %v712, %v711
    %v726 = vpack.c.b16 %v714, %v713
    %v727 = vpack.c.b16 %v716, %v715
    %v728 = vpack.c.b16 %v718, %v717
    %v729 = vpack.c.b16 %v720, %v719
    %v730 = vpack.c.b16 %v722, %v721
    %739 = vmatprep.subr.bf16.mxu0 0
    %740 = vmatpush1.bf16.msra.mxu0 %v602
    %741 = vmatprep.subr.bf16.mxu0 0
    %742 = vmatpush1.bf16.msra.mxu0 %v603
    %743 = vmatprep.subr.bf16.mxu0 0
    %744 = vmatpush1.bf16.msra.mxu0 %v604
    %745 = vmatprep.subr.bf16.mxu0 0
    %746 = vmatpush1.bf16.msra.mxu0 %v605
    %747 = vmatprep.subr.bf16.mxu0 0
    %748 = vmatpush1.bf16.msra.mxu0 %v606
    %749 = vmatprep.subr.bf16.mxu0 0
    %750 = vmatpush1.bf16.msra.mxu0 %v607
    %751 = vmatprep.subr.bf16.mxu0 0
    %752 = vmatpush1.bf16.msra.mxu0 %v608
    %753 = vmatprep.subr.bf16.mxu0 0
    %754 = vmatpush1.bf16.msra.mxu0 %v609
    %755 = vmatprep.subr.bf16.mxu0 0
    %756 = vmatpush1.bf16.msra.mxu0 0
    %757 = vmatprep.subr.bf16.mxu0 0
    %758 = vmatpush1.bf16.msra.mxu0 0
    %759 = vmatprep.subr.bf16.mxu0 0
    %760 = vmatpush1.bf16.msra.mxu0 0
    %761 = vmatprep.subr.bf16.mxu0 0
    %762 = vmatpush1.bf16.msra.mxu0 0
    %763 = vmatprep.subr.bf16.mxu0 0
    %764 = vmatpush1.bf16.msra.mxu0 0
    %765 = vmatprep.subr.bf16.mxu0 0
    %766 = vmatpush1.bf16.msra.mxu0 0
    %767 = vmatprep.subr.bf16.mxu0 0
    %768 = vmatpush1.bf16.msra.mxu0 0
    %769 = vmatprep.subr.bf16.mxu0 0
    %770 = vmatpush1.bf16.msra.mxu0 0
    %771 = vmatprep.mubr.bf16.mxu0 0
    %772 = vmatmul.mubr.bf16.gmra.mrb[0].mxu0 %v723
    %v773 = vpop.f32.mrb[0].mxu0
    %v774 = vadd.f32 %v629, %v773
    %v775 = vpop.f32.mrb[0].mxu0
    %v776 = vpop.f32.mrb[0].mxu0
    %v777 = vadd.f32 %v633, %v776
    %v778 = vpop.f32.mrb[0].mxu0
    %779 = vmatprep.mubr.bf16.mxu0 0
    %780 = vmatmul.mubr.bf16.gmra.mrb[0].mxu0 %v724
    %v781 = vpop.f32.mrb[0].mxu0
    %v782 = vadd.f32 %v637, %v781
    %v783 = vpop.f32.mrb[0].mxu0
    %v784 = vpop.f32.mrb[0].mxu0
    %v785 = vadd.f32 %v641, %v784
    %v786 = vpop.f32.mrb[0].mxu0
    %787 = vmatprep.mubr.bf16.mxu0 0
    %788 = vmatmul.mubr.bf16.gmra.mrb[0].mxu0 %v725
    %v789 = vpop.f32.mrb[0].mxu0
    %v790 = vadd.f32 %v645, %v789
    %v791 = vpop.f32.mrb[0].mxu0
    %v792 = vpop.f32.mrb[0].mxu0
    %v793 = vadd.f32 %v649, %v792
    %v794 = vpop.f32.mrb[0].mxu0
    %795 = vmatprep.mubr.bf16.mxu0 0
    %796 = vmatmul.mubr.bf16.gmra.mrb[0].mxu0 %v726
    %v797 = vpop.f32.mrb[0].mxu0
    %v798 = vadd.f32 %v653, %v797
    %v799 = vpop.f32.mrb[0].mxu0
    %v800 = vpop.f32.mrb[0].mxu0
    %v801 = vadd.f32 %v657, %v800
    %v802 = vpop.f32.mrb[0].mxu0
    %803 = vmatprep.mubr.bf16.mxu0 0
    %804 = vmatmul.mubr.bf16.gmra.mrb[0].mxu0 %v727
    %v805 = vpop.f32.mrb[0].mxu0
    %v806 = vadd.f32 %v661, %v805
    %v807 = vpop.f32.mrb[0].mxu0
    %v808 = vpop.f32.mrb[0].mxu0
    %v809 = vadd.f32 %v665, %v808
    %v810 = vpop.f32.mrb[0].mxu0
    %811 = vmatprep.mubr.bf16.mxu0 0
    %812 = vmatmul.mubr.bf16.gmra.mrb[0].mxu0 %v728
    %v813 = vpop.f32.mrb[0].mxu0
    %v814 = vadd.f32 %v669, %v813
    %v815 = vpop.f32.mrb[0].mxu0
    %v816 = vpop.f32.mrb[0].mxu0
    %v817 = vadd.f32 %v673, %v816
    %v818 = vpop.f32.mrb[0].mxu0
    %819 = vmatprep.mubr.bf16.mxu0 0
    %820 = vmatmul.mubr.bf16.gmra.mrb[0].mxu0 %v729
    %v821 = vpop.f32.mrb[0].mxu0
    %v822 = vadd.f32 %v677, %v821
    %v823 = vpop.f32.mrb[0].mxu0
    %v824 = vpop.f32.mrb[0].mxu0
    %v825 = vadd.f32 %v681, %v824
    %v826 = vpop.f32.mrb[0].mxu0
    %827 = vmatprep.mubr.bf16.mxu0 0
    %828 = vmatmul.mubr.bf16.gmra.mrb[0].mxu0 %v730
    %v829 = vpop.f32.mrb[0].mxu0
    %v830 = vadd.f32 %v685, %v829
    %v831 = vpop.f32.mrb[0].mxu0
    %v832 = vpop.f32.mrb[0].mxu0
    %v833 = vadd.f32 %v689, %v832
    %v834 = vpop.f32.mrb[0].mxu0
    %835 = vdwg.mxu0
    %v836 = vmax.f32 %v774, 0.0
    %v837 = vmax.f32 %v777, 0.0
    %v838 = vmax.f32 %v782, 0.0
    %v839 = vmax.f32 %v785, 0.0
    %v840 = vmax.f32 %v790, 0.0
    %v841 = vmax.f32 %v793, 0.0
    %v842 = vmax.f32 %v798, 0.0
    %v843 = vmax.f32 %v801, 0.0
    %v844 = vmax.f32 %v806, 0.0
    %v845 = vmax.f32 %v809, 0.0
    %v846 = vmax.f32 %v814, 0.0
    %v847 = vmax.f32 %v817, 0.0
    %v848 = vmax.f32 %v822, 0.0
    %v849 = vmax.f32 %v825, 0.0
    %v850 = vmax.f32 %v830, 0.0
    %v851 = vmax.f32 %v833, 0.0
    %v852 = vpack.c.bf16 %v837, %v836
    %v853 = vpack.c.bf16 %v839, %v838
    %v854 = vpack.c.bf16 %v841, %v840
    %v855 = vpack.c.bf16 %v843, %v842
    %v856 = vpack.c.bf16 %v845, %v844
    %v857 = vpack.c.bf16 %v847, %v846
    %v858 = vpack.c.bf16 %v849, %v848
    %v859 = vpack.c.bf16 %v851, %v850
    %s860 = scalar_lea.vmem [#allocation2], 128
    %v861 = vld [vmem:[%s860] sm:$0xf]
    %v862 = vld [vmem:[%s860 + $0x4] sm:$0xf]
    %v863 = vld [vmem:[%s860 + $0x8] sm:$0xf]
    %v864 = vld [vmem:[%s860 + $0xc] sm:$0xf]
    %v865 = vld [vmem:[%s860 + $0x10] sm:$0xf]
    %v866 = vld [vmem:[%s860 + $0x14] sm:$0xf]
    %v867 = vld [vmem:[%s860 + $0x18] sm:$0xf]
    %v868 = vld [vmem:[%s860 + $0x1c] sm:$0xf]
    %v869 = vld [vmem:[%s860 + $0x20] sm:$0xf]
    %v870 = vld [vmem:[%s860 + $0x24] sm:$0xf]
    %v871 = vld [vmem:[%s860 + $0x28] sm:$0xf]
    %v872 = vld [vmem:[%s860 + $0x2c] sm:$0xf]
    %v873 = vld [vmem:[%s860 + $0x30] sm:$0xf]
    %v874 = vld [vmem:[%s860 + $0x34] sm:$0xf]
    %v875 = vld [vmem:[%s860 + $0x38] sm:$0xf]
    %v876 = vld [vmem:[%s860 + $0x3c] sm:$0xf]
    %877 = vset.pattern.permute.xlu0 3
    %878 = vperm.xlu0 %877, %v67
    %v879 = vpop.permute.xlu0 %878
    %881 = vset.pattern.permute.xlu0 3
    %882 = vperm.xlu0 %881, %v68
    %v883 = vpop.permute.xlu0 %882
    %885 = vset.pattern.permute.xlu0 3
    %886 = vperm.xlu0 %885, %v69
    %v887 = vpop.permute.xlu0 %886
    %889 = vset.pattern.permute.xlu0 3
    %890 = vperm.xlu0 %889, %v70
    %v891 = vpop.permute.xlu0 %890
    %893 = vset.pattern.permute.xlu0 3
    %894 = vperm.xlu0 %893, %v71
    %v895 = vpop.permute.xlu0 %894
    %897 = vset.pattern.permute.xlu0 3
    %898 = vperm.xlu0 %897, %v72
    %v899 = vpop.permute.xlu0 %898
    %901 = vset.pattern.permute.xlu0 3
    %902 = vperm.xlu0 %901, %v73
    %v903 = vpop.permute.xlu0 %902
    %905 = vset.pattern.permute.xlu0 3
    %906 = vperm.xlu0 %905, %v74
    %v907 = vpop.permute.xlu0 %906
    %909 = vset.pattern.permute.xlu0 3
    %910 = vperm.xlu0 %909, %v75
    %v911 = vpop.permute.xlu0 %910
    %913 = vset.pattern.permute.xlu0 3
    %914 = vperm.xlu0 %913, %v76
    %v915 = vpop.permute.xlu0 %914
    %917 = vset.pattern.permute.xlu0 3
    %918 = vperm.xlu0 %917, %v77
    %v919 = vpop.permute.xlu0 %918
    %921 = vset.pattern.permute.xlu0 3
    %922 = vperm.xlu0 %921, %v78
    %v923 = vpop.permute.xlu0 %922
    %925 = vset.pattern.permute.xlu0 3
    %926 = vperm.xlu0 %925, %v79
    %v927 = vpop.permute.xlu0 %926
    %929 = vset.pattern.permute.xlu0 3
    %930 = vperm.xlu0 %929, %v80
    %v931 = vpop.permute.xlu0 %930
    %933 = vset.pattern.permute.xlu0 3
    %934 = vperm.xlu0 %933, %v81
    %v935 = vpop.permute.xlu0 %934
    %937 = vset.pattern.permute.xlu0 3
    %938 = vperm.xlu0 %937, %v82
    %v939 = vpop.permute.xlu0 %938
    %v957 = vunpack.c.l.b16 %v861
    %v958 = vunpack.c.l.b16 %v862
    %v959 = vunpack.c.l.b16 %v863
    %v960 = vunpack.c.l.b16 %v864
    %v961 = vunpack.c.l.b16 %v865
    %v962 = vunpack.c.l.b16 %v866
    %v963 = vunpack.c.l.b16 %v867
    %v964 = vunpack.c.l.b16 %v868
    %v965 = vunpack.c.l.b16 %v869
    %v966 = vunpack.c.l.b16 %v870
    %v967 = vunpack.c.l.b16 %v871
    %v968 = vunpack.c.l.b16 %v872
    %v969 = vunpack.c.l.b16 %v873
    %v970 = vunpack.c.l.b16 %v874
    %v971 = vunpack.c.l.b16 %v875
    %v972 = vunpack.c.l.b16 %v876
    %v973 = vpack.c.b16 %v958, %v957
    %v974 = vpack.c.b16 %v960, %v959
    %v975 = vpack.c.b16 %v962, %v961
    %v976 = vpack.c.b16 %v964, %v963
    %v977 = vpack.c.b16 %v966, %v965
    %v978 = vpack.c.b16 %v968, %v967
    %v979 = vpack.c.b16 %v970, %v969
    %v980 = vpack.c.b16 %v972, %v971
    %989 = vmatprep.subr.bf16.mxu0 0
    %990 = vmatpush1.bf16.msra.mxu0 %v852
    %991 = vmatprep.subr.bf16.mxu0 0
    %992 = vmatpush1.bf16.msra.mxu0 %v853
    %993 = vmatprep.subr.bf16.mxu0 0
    %994 = vmatpush1.bf16.msra.mxu0 %v854
    %995 = vmatprep.subr.bf16.mxu0 0
    %996 = vmatpush1.bf16.msra.mxu0 %v855
    %997 = vmatprep.subr.bf16.mxu0 0
    %998 = vmatpush1.bf16.msra.mxu0 %v856
    %999 = vmatprep.subr.bf16.mxu0 0
    %1000 = vmatpush1.bf16.msra.mxu0 %v857
    %1001 = vmatprep.subr.bf16.mxu0 0
    %1002 = vmatpush1.bf16.msra.mxu0 %v858
    %1003 = vmatprep.subr.bf16.mxu0 0
    %1004 = vmatpush1.bf16.msra.mxu0 %v859
    %1005 = vmatprep.subr.bf16.mxu0 0
    %1006 = vmatpush1.bf16.msra.mxu0 0
    %1007 = vmatprep.subr.bf16.mxu0 0
    %1008 = vmatpush1.bf16.msra.mxu0 0
    %1009 = vmatprep.subr.bf16.mxu0 0
    %1010 = vmatpush1.bf16.msra.mxu0 0
    %1011 = vmatprep.subr.bf16.mxu0 0
    %1012 = vmatpush1.bf16.msra.mxu0 0
    %1013 = vmatprep.subr.bf16.mxu0 0
    %1014 = vmatpush1.bf16.msra.mxu0 0
    %1015 = vmatprep.subr.bf16.mxu0 0
    %1016 = vmatpush1.bf16.msra.mxu0 0
    %1017 = vmatprep.subr.bf16.mxu0 0
    %1018 = vmatpush1.bf16.msra.mxu0 0
    %1019 = vmatprep.subr.bf16.mxu0 0
    %1020 = vmatpush1.bf16.msra.mxu0 0
    %1021 = vmatprep.mubr.bf16.mxu0 0
    %1022 = vmatmul.mubr.bf16.gmra.mrb[0].mxu0 %v973
    %v1023 = vpop.f32.mrb[0].mxu0
    %v1024 = vadd.f32 %v879, %v1023
    %v1025 = vpop.f32.mrb[0].mxu0
    %v1026 = vpop.f32.mrb[0].mxu0
    %v1027 = vadd.f32 %v883, %v1026
    %v1028 = vpop.f32.mrb[0].mxu0
    %1029 = vmatprep.mubr.bf16.mxu0 0
    %1030 = vmatmul.mubr.bf16.gmra.mrb[0].mxu0 %v974
    %v1031 = vpop.f32.mrb[0].mxu0
    %v1032 = vadd.f32 %v887, %v1031
    %v1033 = vpop.f32.mrb[0].mxu0
    %v1034 = vpop.f32.mrb[0].mxu0
    %v1035 = vadd.f32 %v891, %v1034
    %v1036 = vpop.f32.mrb[0].mxu0
    %1037 = vmatprep.mubr.bf16.mxu0 0
    %1038 = vmatmul.mubr.bf16.gmra.mrb[0].mxu0 %v975
    %v1039 = vpop.f32.mrb[0].mxu0
    %v1040 = vadd.f32 %v895, %v1039
    %v1041 = vpop.f32.mrb[0].mxu0
    %v1042 = vpop.f32.mrb[0].mxu0
    %v1043 = vadd.f32 %v899, %v1042
    %v1044 = vpop.f32.mrb[0].mxu0
    %1045 = vmatprep.mubr.bf16.mxu0 0
    %1046 = vmatmul.mubr.bf16.gmra.mrb[0].mxu0 %v976
    %v1047 = vpop.f32.mrb[0].mxu0
    %v1048 = vadd.f32 %v903, %v1047
    %v1049 = vpop.f32.mrb[0].mxu0
    %v1050 = vpop.f32.mrb[0].mxu0
    %v1051 = vadd.f32 %v907, %v1050
    %v1052 = vpop.f32.mrb[0].mxu0
    %1053 = vmatprep.mubr.bf16.mxu0 0
    %1054 = vmatmul.mubr.bf16.gmra.mrb[0].mxu0 %v977
    %v1055 = vpop.f32.mrb[0].mxu0
    %v1056 = vadd.f32 %v911, %v1055
    %v1057 = vpop.f32.mrb[0].mxu0
    %v1058 = vpop.f32.mrb[0].mxu0
    %v1059 = vadd.f32 %v915, %v1058
    %v1060 = vpop.f32.mrb[0].mxu0
    %1061 = vmatprep.mubr.bf16.mxu0 0
    %1062 = vmatmul.mubr.bf16.gmra.mrb[0].mxu0 %v978
    %v1063 = vpop.f32.mrb[0].mxu0
    %v1064 = vadd.f32 %v919, %v1063
    %v1065 = vpop.f32.mrb[0].mxu0
    %v1066 = vpop.f32.mrb[0].mxu0
    %v1067 = vadd.f32 %v923, %v1066
    %v1068 = vpop.f32.mrb[0].mxu0
    %1069 = vmatprep.mubr.bf16.mxu0 0
    %1070 = vmatmul.mubr.bf16.gmra.mrb[0].mxu0 %v979
    %v1071 = vpop.f32.mrb[0].mxu0
    %v1072 = vadd.f32 %v927, %v1071
    %v1073 = vpop.f32.mrb[0].mxu0
    %v1074 = vpop.f32.mrb[0].mxu0
    %v1075 = vadd.f32 %v931, %v1074
    %v1076 = vpop.f32.mrb[0].mxu0
    %1077 = vmatprep.mubr.bf16.mxu0 0
    %1078 = vmatmul.mubr.bf16.gmra.mrb[0].mxu0 %v980
    %v1079 = vpop.f32.mrb[0].mxu0
    %v1080 = vadd.f32 %v935, %v1079
    %v1081 = vpop.f32.mrb[0].mxu0
    %v1082 = vpop.f32.mrb[0].mxu0
    %v1083 = vadd.f32 %v939, %v1082
    %v1084 = vpop.f32.mrb[0].mxu0
    %1085 = vdwg.mxu0
    %v1086 = vmax.f32 %v1024, 0.0
    %v1087 = vmax.f32 %v1027, 0.0
    %v1088 = vmax.f32 %v1032, 0.0
    %v1089 = vmax.f32 %v1035, 0.0
    %v1090 = vmax.f32 %v1040, 0.0
    %v1091 = vmax.f32 %v1043, 0.0
    %v1092 = vmax.f32 %v1048, 0.0
    %v1093 = vmax.f32 %v1051, 0.0
    %v1094 = vmax.f32 %v1056, 0.0
    %v1095 = vmax.f32 %v1059, 0.0
    %v1096 = vmax.f32 %v1064, 0.0
    %v1097 = vmax.f32 %v1067, 0.0
    %v1098 = vmax.f32 %v1072, 0.0
    %v1099 = vmax.f32 %v1075, 0.0
    %v1100 = vmax.f32 %v1080, 0.0
    %v1101 = vmax.f32 %v1083, 0.0
    %v1102 = vpack.c.bf16 %v1087, %v1086
    %v1103 = vpack.c.bf16 %v1089, %v1088
    %v1104 = vpack.c.bf16 %v1091, %v1090
    %v1105 = vpack.c.bf16 %v1093, %v1092
    %v1106 = vpack.c.bf16 %v1095, %v1094
    %v1107 = vpack.c.bf16 %v1097, %v1096
    %v1108 = vpack.c.bf16 %v1099, %v1098
    %v1109 = vpack.c.bf16 %v1101, %v1100
    %s1110 = scalar_lea.vmem [#allocation2], 192
    %v1111 = vld [vmem:[%s1110] sm:$0xf]
    %v1112 = vld [vmem:[%s1110 + $0x4] sm:$0xf]
    %v1113 = vld [vmem:[%s1110 + $0x8] sm:$0xf]
    %v1114 = vld [vmem:[%s1110 + $0xc] sm:$0xf]
    %v1115 = vld [vmem:[%s1110 + $0x10] sm:$0xf]
    %v1116 = vld [vmem:[%s1110 + $0x14] sm:$0xf]
    %v1117 = vld [vmem:[%s1110 + $0x18] sm:$0xf]
    %v1118 = vld [vmem:[%s1110 + $0x1c] sm:$0xf]
    %v1119 = vld [vmem:[%s1110 + $0x20] sm:$0xf]
    %v1120 = vld [vmem:[%s1110 + $0x24] sm:$0xf]
    %v1121 = vld [vmem:[%s1110 + $0x28] sm:$0xf]
    %v1122 = vld [vmem:[%s1110 + $0x2c] sm:$0xf]
    %v1123 = vld [vmem:[%s1110 + $0x30] sm:$0xf]
    %v1124 = vld [vmem:[%s1110 + $0x34] sm:$0xf]
    %v1125 = vld [vmem:[%s1110 + $0x38] sm:$0xf]
    %v1126 = vld [vmem:[%s1110 + $0x3c] sm:$0xf]
    %1127 = vset.pattern.permute.xlu0 4
    %1128 = vperm.xlu0 %1127, %v67
    %v1129 = vpop.permute.xlu0 %1128
    %1131 = vset.pattern.permute.xlu0 4
    %1132 = vperm.xlu0 %1131, %v68
    %v1133 = vpop.permute.xlu0 %1132
    %1134 = vset.pattern.permute.xlu0 4
    %1135 = vperm.xlu0 %1134, %v69
    %v1136 = vpop.permute.xlu0 %1135
    %1137 = vset.pattern.permute.xlu0 4
    %1138 = vperm.xlu0 %1137, %v70
    %v1139 = vpop.permute.xlu0 %1138
    %1140 = vset.pattern.permute.xlu0 4
    %1141 = vperm.xlu0 %1140, %v71
    %v1142 = vpop.permute.xlu0 %1141
    %1143 = vset.pattern.permute.xlu0 4
    %1144 = vperm.xlu0 %1143, %v72
    %v1145 = vpop.permute.xlu0 %1144
    %1146 = vset.pattern.permute.xlu0 4
    %1147 = vperm.xlu0 %1146, %v73
    %v1148 = vpop.permute.xlu0 %1147
    %1149 = vset.pattern.permute.xlu0 4
    %1150 = vperm.xlu0 %1149, %v74
    %v1151 = vpop.permute.xlu0 %1150
    %1152 = vset.pattern.permute.xlu0 4
    %1153 = vperm.xlu0 %1152, %v75
    %v1154 = vpop.permute.xlu0 %1153
    %1155 = vset.pattern.permute.xlu0 4
    %1156 = vperm.xlu0 %1155, %v76
    %v1157 = vpop.permute.xlu0 %1156
    %1158 = vset.pattern.permute.xlu0 4
    %1159 = vperm.xlu0 %1158, %v77
    %v1160 = vpop.permute.xlu0 %1159
    %1161 = vset.pattern.permute.xlu0 4
    %1162 = vperm.xlu0 %1161, %v78
    %v1163 = vpop.permute.xlu0 %1162
    %1164 = vset.pattern.permute.xlu0 4
    %1165 = vperm.xlu0 %1164, %v79
    %v1166 = vpop.permute.xlu0 %1165
    %1167 = vset.pattern.permute.xlu0 4
    %1168 = vperm.xlu0 %1167, %v80
    %v1169 = vpop.permute.xlu0 %1168
    %1170 = vset.pattern.permute.xlu0 4
    %1171 = vperm.xlu0 %1170, %v81
    %v1172 = vpop.permute.xlu0 %1171
    %1173 = vset.pattern.permute.xlu0 4
    %1174 = vperm.xlu0 %1173, %v82
    %v1175 = vpop.permute.xlu0 %1174
    %v1192 = vunpack.c.l.b16 %v1111
    %v1193 = vunpack.c.l.b16 %v1112
    %v1194 = vunpack.c.l.b16 %v1113
    %v1195 = vunpack.c.l.b16 %v1114
    %v1196 = vunpack.c.l.b16 %v1115
    %v1197 = vunpack.c.l.b16 %v1116
    %v1198 = vunpack.c.l.b16 %v1117
    %v1199 = vunpack.c.l.b16 %v1118
    %v1200 = vunpack.c.l.b16 %v1119
    %v1201 = vunpack.c.l.b16 %v1120
    %v1202 = vunpack.c.l.b16 %v1121
    %v1203 = vunpack.c.l.b16 %v1122
    %v1204 = vunpack.c.l.b16 %v1123
    %v1205 = vunpack.c.l.b16 %v1124
    %v1206 = vunpack.c.l.b16 %v1125
    %v1207 = vunpack.c.l.b16 %v1126
    %v1208 = vpack.c.b16 %v1193, %v1192
    %v1209 = vpack.c.b16 %v1195, %v1194
    %v1210 = vpack.c.b16 %v1197, %v1196
    %v1211 = vpack.c.b16 %v1199, %v1198
    %v1212 = vpack.c.b16 %v1201, %v1200
    %v1213 = vpack.c.b16 %v1203, %v1202
    %v1214 = vpack.c.b16 %v1205, %v1204
    %v1215 = vpack.c.b16 %v1207, %v1206
    %1224 = vmatprep.subr.bf16.mxu0 0
    %1225 = vmatpush1.bf16.msra.mxu0 %v1102
    %1226 = vmatprep.subr.bf16.mxu0 0
    %1227 = vmatpush1.bf16.msra.mxu0 %v1103
    %1228 = vmatprep.subr.bf16.mxu0 0
    %1229 = vmatpush1.bf16.msra.mxu0 %v1104
    %1230 = vmatprep.subr.bf16.mxu0 0
    %1231 = vmatpush1.bf16.msra.mxu0 %v1105
    %1232 = vmatprep.subr.bf16.mxu0 0
    %1233 = vmatpush1.bf16.msra.mxu0 %v1106
    %1234 = vmatprep.subr.bf16.mxu0 0
    %1235 = vmatpush1.bf16.msra.mxu0 %v1107
    %1236 = vmatprep.subr.bf16.mxu0 0
    %1237 = vmatpush1.bf16.msra.mxu0 %v1108
    %1238 = vmatprep.subr.bf16.mxu0 0
    %1239 = vmatpush1.bf16.msra.mxu0 %v1109
    %1240 = vmatprep.subr.bf16.mxu0 0
    %1241 = vmatpush1.bf16.msra.mxu0 0
    %1242 = vmatprep.subr.bf16.mxu0 0
    %1243 = vmatpush1.bf16.msra.mxu0 0
    %1244 = vmatprep.subr.bf16.mxu0 0
    %1245 = vmatpush1.bf16.msra.mxu0 0
    %1246 = vmatprep.subr.bf16.mxu0 0
    %1247 = vmatpush1.bf16.msra.mxu0 0
    %1248 = vmatprep.subr.bf16.mxu0 0
    %1249 = vmatpush1.bf16.msra.mxu0 0
    %1250 = vmatprep.subr.bf16.mxu0 0
    %1251 = vmatpush1.bf16.msra.mxu0 0
    %1252 = vmatprep.subr.bf16.mxu0 0
    %1253 = vmatpush1.bf16.msra.mxu0 0
    %1254 = vmatprep.subr.bf16.mxu0 0
    %1255 = vmatpush1.bf16.msra.mxu0 0
    %1256 = vmatprep.mubr.bf16.mxu0 0
    %1257 = vmatmul.mubr.bf16.gmra.mrb[0].mxu0 %v1208
    %v1258 = vpop.f32.mrb[0].mxu0
    %v1259 = vadd.f32 %v1129, %v1258
    %v1260 = vpop.f32.mrb[0].mxu0
    %v1261 = vpop.f32.mrb[0].mxu0
    %v1262 = vpop.f32.mrb[0].mxu0
    %1263 = vmatprep.mubr.bf16.mxu0 0
    %1264 = vmatmul.mubr.bf16.gmra.mrb[0].mxu0 %v1209
    %v1265 = vpop.f32.mrb[0].mxu0
    %v1266 = vpop.f32.mrb[0].mxu0
    %v1267 = vpop.f32.mrb[0].mxu0
    %v1268 = vpop.f32.mrb[0].mxu0
    %1269 = vmatprep.mubr.bf16.mxu0 0
    %1270 = vmatmul.mubr.bf16.gmra.mrb[0].mxu0 %v1210
    %v1271 = vpop.f32.mrb[0].mxu0
    %v1272 = vpop.f32.mrb[0].mxu0
    %v1273 = vpop.f32.mrb[0].mxu0
    %v1274 = vpop.f32.mrb[0].mxu0
    %1275 = vmatprep.mubr.bf16.mxu0 0
    %1276 = vmatmul.mubr.bf16.gmra.mrb[0].mxu0 %v1211
    %v1277 = vpop.f32.mrb[0].mxu0
    %v1278 = vpop.f32.mrb[0].mxu0
    %v1279 = vpop.f32.mrb[0].mxu0
    %v1280 = vpop.f32.mrb[0].mxu0
    %1281 = vmatprep.mubr.bf16.mxu0 0
    %1282 = vmatmul.mubr.bf16.gmra.mrb[0].mxu0 %v1212
    %v1283 = vpop.f32.mrb[0].mxu0
    %v1284 = vpop.f32.mrb[0].mxu0
    %v1285 = vpop.f32.mrb[0].mxu0
    %v1286 = vpop.f32.mrb[0].mxu0
    %1287 = vmatprep.mubr.bf16.mxu0 0
    %1288 = vmatmul.mubr.bf16.gmra.mrb[0].mxu0 %v1213
    %v1289 = vpop.f32.mrb[0].mxu0
    %v1290 = vpop.f32.mrb[0].mxu0
    %v1291 = vpop.f32.mrb[0].mxu0
    %v1292 = vpop.f32.mrb[0].mxu0
    %1293 = vmatprep.mubr.bf16.mxu0 0
    %1294 = vmatmul.mubr.bf16.gmra.mrb[0].mxu0 %v1214
    %v1295 = vpop.f32.mrb[0].mxu0
    %v1296 = vpop.f32.mrb[0].mxu0
    %v1297 = vpop.f32.mrb[0].mxu0
    %v1298 = vpop.f32.mrb[0].mxu0
    %1299 = vmatprep.mubr.bf16.mxu0 0
    %1300 = vmatmul.mubr.bf16.gmra.mrb[0].mxu0 %v1215
    %v1301 = vpop.f32.mrb[0].mxu0
    %v1302 = vpop.f32.mrb[0].mxu0
    %v1303 = vpop.f32.mrb[0].mxu0
    %v1304 = vpop.f32.mrb[0].mxu0
    %1305 = vdwg.mxu0
    %1306 = vst [vmem:[#allocation7] sm:$0xff] %v1259
    // Predicated region
    $region26: #{tpu_custom_call.1} parent=1 // pred_check
      _
    $region27: #{tpu_custom_call.1} parent=1 // pred_check_branch
      %1308 = sbr.rel (0) target = $region29
    $region28: #{tpu_custom_call.1} parent=1 // pred_region
      %s1310 = ssub.s32 128, 128
      %1311 = vsyncadd [#allocation4], %s1310
      %s1313 = sshll.u32 [#allocation7], 4
      %s1314 = int_to_ptr.vmem [resolvable:$true] %s1313
      %1316 = dma.vmem_to_hbm [thread:$0]  %s1314, 128, %s4, [#allocation4]
    $region29: #{tpu_custom_call.1} parent=1 // pred_fallthru
      _
    // Predicated region
    $region30: #{tpu_custom_call.1} parent=1 // pred_check
      _
    $region31: #{tpu_custom_call.1} parent=1 // pred_check_branch
      %1318 = sbr.rel (0) target = $region33
    $region32: #{tpu_custom_call.1} parent=1 // pred_region
      %1319 = dma.done [#allocation4], 128
    $region33: #{tpu_custom_call.1} parent=1 // pred_fallthru
      _
    %1320 = vsyncpa [#allocation3], 1
    %1321 = vsyncpa [#allocation6], 1
    %1322 = vsyncpa [#allocation4], 1

</llo_original>
